<compile_context>
chip_gen: v7x
topology: tpu7x:2x2x1
jax: 0.10.0
libtpu: 0.0.40
codegen_flags: <defaults>
</compile_context>

<pallas_src>
import jax
import jax.numpy as jnp
from jax.experimental import pallas as pl
from jax.experimental.pallas import tpu as pltpu

# ---- packed-parameter slab layout (rows x 128 lanes, zero padded) -----------
IN_DIM = 12                    # fc1 input features (no wrapper padding)
HID = 64                       # true hidden width
LANES = 128                    # padded feature width used for activations
OUT_DIM = 6
OUT_PAD = 8                    # narrow lane-padded output width (cols 6..7 == 0)
W1_R0 = 0                      # W1 rows 0..11   (region [0, 16) zero padded)
W2_R0 = 16                     # W2 rows 16..143 (128 rows, zero padded past 64)
W3_R0 = 144                    # W3 rows 144..271
B1_ROW = 272                   # biases on 8-sublane-aligned rows
B2_ROW = 280
B3_ROW = 288
SLAB_ROWS = 296                # multiple of 8


def mlp_kernel(x_ref, p_ref, o_ref):
    x = x_ref[...]                             # (tb, 12) f32
    w1 = p_ref[W1_R0:W1_R0 + IN_DIM, :]        # (12, 128)
    w2 = p_ref[W2_R0:W2_R0 + LANES, :]         # (128, 128)
    w3 = p_ref[W3_R0:W3_R0 + LANES, :]         # (128, 128)
    b1 = p_ref[B1_ROW:B1_ROW + 1, :].astype(jnp.float32)   # (1, 128)
    b2 = p_ref[B2_ROW:B2_ROW + 1, :].astype(jnp.float32)
    b3 = p_ref[B3_ROW:B3_ROW + 1, :].astype(jnp.float32)

    mxu = p_ref.dtype                          # bf16 slab -> bf16 MXU operands
    h1 = jnp.dot(x.astype(mxu), w1, preferred_element_type=jnp.float32)
    h1 = jnp.maximum(h1 + b1, 0.0)             # f32 bias + ReLU on the VPU
    h2 = jnp.dot(h1.astype(mxu), w2, preferred_element_type=jnp.float32)
    h2 = jnp.maximum(h2 + b2, 0.0)
    out = jnp.dot(h2.astype(mxu), w3, preferred_element_type=jnp.float32) + b3
    # Store only the 8 useful lanes (cols 6..7 are exactly zero by construction).
    o_ref[...] = out[:, :OUT_PAD].astype(o_ref.dtype)       # (tb, 8)


def _round_up(n, m):
    return ((n + m - 1) // m) * m


def pack_params(params, dtype=jnp.float32):
    """Pack (w1,b1,w2,b2,w3,b3) into one zero-padded (296, 128) slab."""
    w1, b1, w2, b2, w3, b3 = params
    slab = jnp.zeros((SLAB_ROWS, LANES), jnp.float32)
    slab = slab.at[W1_R0:W1_R0 + IN_DIM, 0:HID].set(w1)
    slab = slab.at[W2_R0:W2_R0 + HID, 0:HID].set(w2)
    slab = slab.at[W3_R0:W3_R0 + HID, 0:OUT_DIM].set(w3)
    slab = slab.at[B1_ROW, 0:HID].set(b1.reshape(-1))
    slab = slab.at[B2_ROW, 0:HID].set(b2.reshape(-1))
    slab = slab.at[B3_ROW, 0:OUT_DIM].set(b3.reshape(-1))
    return slab.astype(dtype)


def simple_nn_forward(x, packed_params, *, block_b: int = 1024):
    """x: (B, 12) f32; packed_params: (296, 128) slab from pack_params."""
    B = x.shape[0]
    bp8 = _round_up(B, 8)
    # Cap the tile at half the (8-aligned) batch so the parallel grid has >= 2
    # steps whenever the batch allows (keeps both v7x TensorCores busy), but
    # never exceed block_b rows per tile (amortizes per-step overhead).
    tb = max(8, min(block_b, _round_up(pl.cdiv(bp8, 2), 8)))
    bp = _round_up(bp8, tb)
    xp = x if bp == B else jnp.zeros((bp, IN_DIM), x.dtype).at[:B, :].set(x)

    out = pl.pallas_call(
        mlp_kernel,
        out_shape=jax.ShapeDtypeStruct((bp, OUT_PAD), jnp.float32),
        grid=(bp // tb,),
        in_specs=[
            pl.BlockSpec((tb, IN_DIM), lambda i: (i, 0)),        # batch tile
            pl.BlockSpec((SLAB_ROWS, LANES), lambda i: (0, 0)),  # resident weights
        ],
        out_specs=pl.BlockSpec((tb, OUT_PAD), lambda i: (i, 0)),
        compiler_params=pltpu.CompilerParams(
            dimension_semantics=("parallel",)),                  # megacore-shardable
    )(xp, packed_params)
    return out[:B, :OUT_DIM]


def init_params(key):
    """Deterministic init mimicking nn.Linear's uniform(+/- 1/sqrt(fan_in))."""
    dims = [(12, 64), (64, 64), (64, 6)]
    params = []
    for i, (fan_in, fan_out) in enumerate(dims):
        kw, kb, key = jax.random.split(jax.random.fold_in(key, i), 3)
        bound = 1.0 / jnp.sqrt(float(fan_in))
        w = jax.random.uniform(kw, (fan_in, fan_out), jnp.float32, -bound, bound)
        b = jax.random.uniform(kb, (1, fan_out), jnp.float32, -bound, bound)
        params.extend([w, b])
    return tuple(params)


def reference_forward(x, params):
    (w1, b1, w2, b2, w3, b3) = params
    h1 = jnp.maximum(x @ w1 + b1, 0.0)
    h2 = jnp.maximum(h1 @ w2 + b2, 0.0)
    return h2 @ w3 + b3


if __name__ == "__main__":
    key = jax.random.PRNGKey(0)
    params = init_params(key)
    slab_f32 = pack_params(params, jnp.float32)           # exact path (v5e default)
    slab_bf16 = pack_params(params, jnp.bfloat16)          # v6e / v7x path

    # Small aligned batch (single grid step).
    x = jax.random.normal(jax.random.fold_in(key, 100), (8, 12), jnp.float32)
    ref = reference_forward(x, params)

    out = jax.block_until_ready(simple_nn_forward(x, slab_f32))
    assert out.shape == (8, 6), out.shape
    assert jnp.allclose(out, ref, atol=1e-4, rtol=1e-4), "mismatch vs reference (f32)"

    out_bf16 = jax.block_until_ready(simple_nn_forward(x, slab_bf16))
    assert out_bf16.shape == (8, 6), out_bf16.shape
    assert jnp.allclose(out_bf16, ref, atol=5e-2, rtol=5e-2), "mismatch vs reference (bf16)"

    # Ragged batch: exercises batch padding and a 2-step parallel grid.
    x2 = jax.random.normal(jax.random.fold_in(key, 101), (20, 12), jnp.float32)
    ref2 = reference_forward(x2, params)
    out2 = jax.block_until_ready(simple_nn_forward(x2, slab_f32))
    assert out2.shape == (20, 6), out2.shape
    assert jnp.allclose(out2, ref2, atol=1e-4, rtol=1e-4), "mismatch vs reference (ragged)"

    print("KERNEL_OK")
</pallas_src>

<mosaic_0001>
module attributes {stable_mosaic.version = 11 : i64} {
  func.func @mlp_kernel(%arg0: i32, %arg1: memref<8x12xf32, #tpu.memory_space<vmem>>, %arg2: memref<296x128xf32, #tpu.memory_space<vmem>>, %arg3: memref<8x8xf32, #tpu.memory_space<vmem>>) attributes {dimension_semantics = [#tpu.dimension_semantics<parallel>], iteration_bounds = array<i64: 1>, scalar_prefetch = 0 : i64, scratch_operands = 0 : i64, tpu.core_type = #tpu.core_type<tc>, window_params = [{transform_indices = @transform_0, window_bounds = array<i64: 8, 12>}, {pipeline_mode = #tpu.pipeline_mode<synchronous>, transform_indices = @transform_1, window_bounds = array<i64: 296, 128>}, {transform_indices = @transform_2, window_bounds = array<i64: 8, 8>}]} {
    %c0 = arith.constant 0 : index
    %c0_0 = arith.constant 0 : index
    %0 = vector.load %arg1[%c0, %c0_0] : memref<8x12xf32, #tpu.memory_space<vmem>>, vector<8x12xf32>
    %c0_1 = arith.constant 0 : index
    %c0_2 = arith.constant 0 : index
    %1 = vector.load %arg2[%c0_1, %c0_2] : memref<296x128xf32, #tpu.memory_space<vmem>>, vector<12x128xf32>
    %c16 = arith.constant 16 : index
    %c0_3 = arith.constant 0 : index
    %2 = vector.load %arg2[%c16, %c0_3] : memref<296x128xf32, #tpu.memory_space<vmem>>, vector<128x128xf32>
    %c144 = arith.constant 144 : index
    %c0_4 = arith.constant 0 : index
    %3 = vector.load %arg2[%c144, %c0_4] : memref<296x128xf32, #tpu.memory_space<vmem>>, vector<128x128xf32>
    %c272 = arith.constant 272 : index
    %c0_5 = arith.constant 0 : index
    %4 = vector.load %arg2[%c272, %c0_5] : memref<296x128xf32, #tpu.memory_space<vmem>>, vector<1x128xf32>
    %c280 = arith.constant 280 : index
    %c0_6 = arith.constant 0 : index
    %5 = vector.load %arg2[%c280, %c0_6] : memref<296x128xf32, #tpu.memory_space<vmem>>, vector<1x128xf32>
    %c288 = arith.constant 288 : index
    %c0_7 = arith.constant 0 : index
    %6 = vector.load %arg2[%c288, %c0_7] : memref<296x128xf32, #tpu.memory_space<vmem>>, vector<1x128xf32>
    %cst = arith.constant dense<0.000000e+00> : vector<8x128xf32>
    %7 = tpu.matmul %0, %1, %cst {dimension_numbers = #tpu.dot_dimension_numbers<[1], [0], [0], [1], [0, 0, 1, 1], [], []>} : vector<8x12xf32>, vector<12x128xf32>, vector<8x128xf32> -> vector<8x128xf32>
    %8 = vector.broadcast %4 : vector<1x128xf32> to vector<8x128xf32>
    %9 = arith.addf %7, %8 : vector<8x128xf32>
    %cst_8 = arith.constant 0.000000e+00 : f32
    %10 = vector.broadcast %cst_8 : f32 to vector<8x128xf32>
    %11 = arith.maximumf %9, %10 : vector<8x128xf32>
    %cst_9 = arith.constant dense<0.000000e+00> : vector<8x128xf32>
    %12 = tpu.matmul %11, %2, %cst_9 {dimension_numbers = #tpu.dot_dimension_numbers<[1], [0], [0], [1], [0, 0, 1, 1], [], []>} : vector<8x128xf32>, vector<128x128xf32>, vector<8x128xf32> -> vector<8x128xf32>
    %13 = vector.broadcast %5 : vector<1x128xf32> to vector<8x128xf32>
    %14 = arith.addf %12, %13 : vector<8x128xf32>
    %cst_10 = arith.constant 0.000000e+00 : f32
    %15 = vector.broadcast %cst_10 : f32 to vector<8x128xf32>
    %16 = arith.maximumf %14, %15 : vector<8x128xf32>
    %cst_11 = arith.constant dense<0.000000e+00> : vector<8x128xf32>
    %17 = tpu.matmul %16, %3, %cst_11 {dimension_numbers = #tpu.dot_dimension_numbers<[1], [0], [0], [1], [0, 0, 1, 1], [], []>} : vector<8x128xf32>, vector<128x128xf32>, vector<8x128xf32> -> vector<8x128xf32>
    %18 = vector.broadcast %6 : vector<1x128xf32> to vector<8x128xf32>
    %19 = arith.addf %17, %18 : vector<8x128xf32>
    %20 = vector.extract_strided_slice %19 {offsets = [0, 0], sizes = [8, 8], strides = [1, 1]} : vector<8x128xf32> to vector<8x8xf32>
    %c0_12 = arith.constant 0 : index
    %c0_13 = arith.constant 0 : index
    %21 = vector.load %arg3[%c0_12, %c0_13] : memref<8x8xf32, #tpu.memory_space<vmem>>, vector<8x8xf32>
    tpu.vector_store %arg3[%c0_12, %c0_13], %20 {strides = array<i32>} : memref<8x8xf32, #tpu.memory_space<vmem>>, vector<8x8xf32>,
    return
  }
  func.func @transform_0(%arg0: i32) -> (i32, i32) {
    %c0_i32 = arith.constant 0 : i32
    %c0_i32_0 = arith.constant 0 : i32
    return %arg0, %c0_i32 : i32, i32
  }
  func.func @transform_1(%arg0: i32) -> (i32, i32) {
    %c0_i32 = arith.constant 0 : i32
    %c0_i32_0 = arith.constant 0 : i32
    %c0_i32_1 = arith.constant 0 : i32
    return %c0_i32, %c0_i32_0 : i32, i32
  }
  func.func @transform_2(%arg0: i32) -> (i32, i32) {
    %c0_i32 = arith.constant 0 : i32
    %c0_i32_0 = arith.constant 0 : i32
    return %arg0, %c0_i32 : i32, i32
  }
}

</mosaic_0001>

<llo_original>
// kernel: tpu_custom_call.1
$region0: #{tpu_custom_call.1}
  #allocation0 [shape = 'u32[]', space=smem, size = 0x4, offset = 0x4, fixed_abs, tag = 'smem constant byte address 0x4 - core index']
  #allocation1 [shape = 'u32[144,128]{1,0:T(1,128)}', space=vmem, size = 0x12000, scoped, tag = 'internal scratch']
  %s0 = inlined_call_operand.hbm [shape: f32[8,12], index: 0, kind: input, shape index: {}]
  %s1 = inlined_call_operand.hbm [shape: f32[296,128], index: 1, kind: input, shape index: {}]
  %s2 = inlined_call_operand.hbm [shape: f32[8,8], index: 2, kind: output, shape index: {}]
  %s3 = sld [smem:[#allocation0]]
  $region26: #{tpu_custom_call.1} parent=0
    _
  %s5 = ssub.s32 1, %s3
  %s6 = scalar_select 0, %s5, %s3
  $region1: #{tpu_custom_call.1} parent=0
    #allocation2 [shape = 'u8[4096]{0}', space=vmem, size = 0x1000, scoped, tag = 'input window, operand 0, single buffered']
    #allocation3 [shape = 's32[1]{0}', space=sflag, size = 0x4, scoped, tag = 'scoped memory for tpu_custom_call.1']
    #allocation4 [shape = 's32[1]{0}', space=sflag, size = 0x4, scoped, tag = 'scoped memory for tpu_custom_call.1']
    #allocation5 [shape = 'u8[151552]{0}', space=vmem, size = 0x25000, scoped, tag = 'input window, operand 1, single buffered']
    #allocation6 [shape = 's32[1]{0}', space=sflag, size = 0x4, scoped, tag = 'scoped memory for tpu_custom_call.1']
    #allocation7 [shape = 'u8[4096]{0}', space=vmem, size = 0x1000, scoped, tag = 'output window, operand 0, single buffered']
    %7 = vsyncpa [#allocation3], 0
    %8 = vsyncpa [#allocation6], 0
    %9 = vsyncpa [#allocation4], 0
    // Predicated region
    $region2: #{tpu_custom_call.1} parent=1 // pred_check
      _
    $region3: #{tpu_custom_call.1} parent=1 // pred_check_branch
      %11 = sbr.rel (0) target = $region5
    $region4: #{tpu_custom_call.1} parent=1 // pred_region
      %s13 = ssub.s32 128, 128
      %14 = vsyncadd [#allocation3], %s13
      %s16 = sshll.u32 [#allocation2], 4
      %s17 = int_to_ptr.vmem [resolvable:$true] %s16
      %19 = dma.hbm_to_vmem [thread:$0]  %s0, 128, %s17, [#allocation3]
    $region5: #{tpu_custom_call.1} parent=1 // pred_fallthru
      _
    // Predicated region
    $region6: #{tpu_custom_call.1} parent=1 // pred_check
      _
    $region7: #{tpu_custom_call.1} parent=1 // pred_check_branch
      %21 = sbr.rel (0) target = $region9
    $region8: #{tpu_custom_call.1} parent=1 // pred_region
      %s23 = ssub.s32 4736, 4736
      %24 = vsyncadd [#allocation6], %s23
      %s25 = sshll.u32 [#allocation5], 4
      %s26 = int_to_ptr.vmem [resolvable:$true] %s25
      %31 = dma.hbm_to_vmem [thread:$0]  %s1, 4736, %s26, [#allocation6], 128, 128, 8
    $region9: #{tpu_custom_call.1} parent=1 // pred_fallthru
      _
    // Predicated region
    $region10: #{tpu_custom_call.1} parent=1 // pred_check
      _
    $region11: #{tpu_custom_call.1} parent=1 // pred_check_branch
      %33 = sbr.rel (0) target = $region13
    $region12: #{tpu_custom_call.1} parent=1 // pred_region
      %34 = dma.done [#allocation3], 128
    $region13: #{tpu_custom_call.1} parent=1 // pred_fallthru
      _
    // Predicated region
    $region14: #{tpu_custom_call.1} parent=1 // pred_check
      _
    $region15: #{tpu_custom_call.1} parent=1 // pred_check_branch
      %36 = sbr.rel (0) target = $region17
    $region16: #{tpu_custom_call.1} parent=1 // pred_region
      %37 = dma.done [#allocation6], 4736
    $region17: #{tpu_custom_call.1} parent=1 // pred_fallthru
      _
    %v38 = vld [vmem:[#allocation2] sm:$0xff]
    %v39 = vld [vmem:[#allocation5] sm:$0xff]
    %v40 = vld [vmem:[#allocation5 + $0x8] sm:$0xf]
    %v41 = vld [vmem:[#allocation5 + $0x10] sm:$0xff]
    %v42 = vld [vmem:[#allocation5 + $0x18] sm:$0xff]
    %v43 = vld [vmem:[#allocation5 + $0x20] sm:$0xff]
    %v44 = vld [vmem:[#allocation5 + $0x28] sm:$0xff]
    %v45 = vld [vmem:[#allocation5 + $0x30] sm:$0xff]
    %v46 = vld [vmem:[#allocation5 + $0x38] sm:$0xff]
    %v47 = vld [vmem:[#allocation5 + $0x40] sm:$0xff]
    %v48 = vld [vmem:[#allocation5 + $0x48] sm:$0xff]
    %v49 = vld [vmem:[#allocation5 + $0x50] sm:$0xff]
    %v50 = vld [vmem:[#allocation5 + $0x58] sm:$0xff]
    %v51 = vld [vmem:[#allocation5 + $0x60] sm:$0xff]
    %v52 = vld [vmem:[#allocation5 + $0x68] sm:$0xff]
    %v53 = vld [vmem:[#allocation5 + $0x70] sm:$0xff]
    %v54 = vld [vmem:[#allocation5 + $0x78] sm:$0xff]
    %v55 = vld [vmem:[#allocation5 + $0x80] sm:$0xff]
    %v56 = vld [vmem:[#allocation5 + $0x88] sm:$0xff]
    %v57 = vld [vmem:[#allocation5 + $0x90] sm:$0xff]
    %v58 = vld [vmem:[#allocation5 + $0x98] sm:$0xff]
    %v59 = vld [vmem:[#allocation5 + $0xa0] sm:$0xff]
    %v60 = vld [vmem:[#allocation5 + $0xa8] sm:$0xff]
    %v61 = vld [vmem:[#allocation5 + $0xb0] sm:$0xff]
    %v62 = vld [vmem:[#allocation5 + $0xb8] sm:$0xff]
    %v63 = vld [vmem:[#allocation5 + $0xc0] sm:$0xff]
    %v64 = vld [vmem:[#allocation5 + $0xc8] sm:$0xff]
    %v65 = vld [vmem:[#allocation5 + $0xd0] sm:$0xff]
    %v66 = vld [vmem:[#allocation5 + $0xd8] sm:$0xff]
    %v67 = vld [vmem:[#allocation5 + $0xe0] sm:$0xff]
    %v68 = vld [vmem:[#allocation5 + $0xe8] sm:$0xff]
    %v69 = vld [vmem:[#allocation5 + $0xf0] sm:$0xff]
    %v70 = vld [vmem:[#allocation5 + $0xf8] sm:$0xff]
    %v71 = vld [vmem:[#allocation5 + $0x100] sm:$0xff]
    %v72 = vld [vmem:[#allocation5 + $0x108] sm:$0xff]
    %v73 = vld [vmem:[#allocation5 + $0x110] sm:$0x1]
    %v74 = vld [vmem:[#allocation5 + $0x118] sm:$0x1]
    %v75 = vld [vmem:[#allocation5 + $0x120] sm:$0x1]
    %v76 = vlaneseq
    %v77 = vshrl.u32 %v76, 7
    %v78 = vsub.s32 0, %v77
    %v79 = vrot.slane %v73, %v78
    %vm80 = vcmask 97280
    %v82 = vsel %vm80, %v38, 0
    %vm84 = vcmask 1043456
    %v86 = vsel %vm84, %v40, 0
    %88 = vmatprep.subr.mxu0 0.0
    %89 = vmatpush1.msra.mxu0 %v39
    %90 = vmatprep.subr.mxu0 0.0
    %91 = vmatpush1.msra.mxu0 %v86
    %92 = vmatprep.subr.mxu0 0.0
    %93 = vmatpush1.msra.mxu0 0.0
    %94 = vmatprep.subr.mxu0 0.0
    %95 = vmatpush1.msra.mxu0 0.0
    %96 = vmatprep.subr.mxu0 0.0
    %97 = vmatpush1.msra.mxu0 0.0
    %98 = vmatprep.subr.mxu0 0.0
    %99 = vmatpush1.msra.mxu0 0.0
    %100 = vmatprep.subr.mxu0 0.0
    %101 = vmatpush1.msra.mxu0 0.0
    %102 = vmatprep.subr.mxu0 0.0
    %103 = vmatpush1.msra.mxu0 0.0
    %104 = vmatprep.subr.mxu0 0.0
    %105 = vmatpush1.msra.mxu0 0.0
    %106 = vmatprep.subr.mxu0 0.0
    %107 = vmatpush1.msra.mxu0 0.0
    %108 = vmatprep.subr.mxu0 0.0
    %109 = vmatpush1.msra.mxu0 0.0
    %110 = vmatprep.subr.mxu0 0.0
    %111 = vmatpush1.msra.mxu0 0.0
    %112 = vmatprep.subr.mxu0 0.0
    %113 = vmatpush1.msra.mxu0 0.0
    %114 = vmatprep.subr.mxu0 0.0
    %115 = vmatpush1.msra.mxu0 0.0
    %116 = vmatprep.subr.mxu0 0.0
    %117 = vmatpush1.msra.mxu0 0.0
    %118 = vmatprep.subr.mxu0 0.0
    %119 = vmatpush1.msra.mxu0 0.0
    %120 = vmatprep.subr.mxu0 0.0
    %121 = vmatpush1.msra.mxu0 0.0
    %122 = vmatprep.subr.mxu0 0.0
    %123 = vmatpush1.msra.mxu0 0.0
    %124 = vmatprep.subr.mxu0 0.0
    %125 = vmatpush1.msra.mxu0 0.0
    %126 = vmatprep.subr.mxu0 0.0
    %127 = vmatpush1.msra.mxu0 0.0
    %128 = vmatprep.subr.mxu0 0.0
    %129 = vmatpush1.msra.mxu0 0.0
    %130 = vmatprep.subr.mxu0 0.0
    %131 = vmatpush1.msra.mxu0 0.0
    %132 = vmatprep.subr.mxu0 0.0
    %133 = vmatpush1.msra.mxu0 0.0
    %134 = vmatprep.subr.mxu0 0.0
    %135 = vmatpush1.msra.mxu0 0.0
    %136 = vmatprep.subr.mxu0 0.0
    %137 = vmatpush1.msra.mxu0 0.0
    %138 = vmatprep.subr.mxu0 0.0
    %139 = vmatpush1.msra.mxu0 0.0
    %140 = vmatprep.subr.mxu0 0.0
    %141 = vmatpush1.msra.mxu0 0.0
    %142 = vmatprep.subr.mxu0 0.0
    %143 = vmatpush1.msra.mxu0 0.0
    %144 = vmatprep.subr.mxu0 0.0
    %145 = vmatpush1.msra.mxu0 0.0
    %146 = vmatprep.subr.mxu0 0.0
    %147 = vmatpush1.msra.mxu0 0.0
    %148 = vmatprep.subr.mxu0 0.0
    %149 = vmatpush1.msra.mxu0 0.0
    %150 = vmatprep.subr.mxu0 0.0
    %151 = vmatpush1.msra.mxu0 0.0
    %152 = vmatprep.mubr.f32.mxu0 0.0
    %153 = vmatmul.mubr.f32.gmra.mrb[0].mxu0 %v82
    %v154 = vpop.f32.mrb[0].mxu0
    %v155 = vadd.f32 %v79, %v154
    %v156 = vpop.f32.mrb[0].mxu0
    %157 = vdwg.mxu0
    %v158 = vmax.f32 %v155, 0.0
    %v159 = vlaneseq
    %v160 = vshrl.u32 %v159, 7
    %v161 = vsub.s32 0, %v160
    %v162 = vrot.slane %v74, %v161
    %163 = vmatprep.subr.mxu0 0.0
    %164 = vmatpush1.msra.mxu0 %v41
    %165 = vmatprep.subr.mxu0 0.0
    %166 = vmatpush1.msra.mxu0 %v42
    %167 = vmatprep.subr.mxu0 0.0
    %168 = vmatpush1.msra.mxu0 %v43
    %169 = vmatprep.subr.mxu0 0.0
    %170 = vmatpush1.msra.mxu0 %v44
    %171 = vmatprep.subr.mxu0 0.0
    %172 = vmatpush1.msra.mxu0 %v45
    %173 = vmatprep.subr.mxu0 0.0
    %174 = vmatpush1.msra.mxu0 %v46
    %175 = vmatprep.subr.mxu0 0.0
    %176 = vmatpush1.msra.mxu0 %v47
    %177 = vmatprep.subr.mxu0 0.0
    %178 = vmatpush1.msra.mxu0 %v48
    %179 = vmatprep.subr.mxu0 0.0
    %180 = vmatpush1.msra.mxu0 %v49
    %181 = vmatprep.subr.mxu0 0.0
    %182 = vmatpush1.msra.mxu0 %v50
    %183 = vmatprep.subr.mxu0 0.0
    %184 = vmatpush1.msra.mxu0 %v51
    %185 = vmatprep.subr.mxu0 0.0
    %186 = vmatpush1.msra.mxu0 %v52
    %187 = vmatprep.subr.mxu0 0.0
    %188 = vmatpush1.msra.mxu0 %v53
    %189 = vmatprep.subr.mxu0 0.0
    %190 = vmatpush1.msra.mxu0 %v54
    %191 = vmatprep.subr.mxu0 0.0
    %192 = vmatpush1.msra.mxu0 %v55
    %193 = vmatprep.subr.mxu0 0.0
    %194 = vmatpush1.msra.mxu0 %v56
    %195 = vmatprep.subr.mxu0 0.0
    %196 = vmatpush1.msra.mxu0 0.0
    %197 = vmatprep.subr.mxu0 0.0
    %198 = vmatpush1.msra.mxu0 0.0
    %199 = vmatprep.subr.mxu0 0.0
    %200 = vmatpush1.msra.mxu0 0.0
    %201 = vmatprep.subr.mxu0 0.0
    %202 = vmatpush1.msra.mxu0 0.0
    %203 = vmatprep.subr.mxu0 0.0
    %204 = vmatpush1.msra.mxu0 0.0
    %205 = vmatprep.subr.mxu0 0.0
    %206 = vmatpush1.msra.mxu0 0.0
    %207 = vmatprep.subr.mxu0 0.0
    %208 = vmatpush1.msra.mxu0 0.0
    %209 = vmatprep.subr.mxu0 0.0
    %210 = vmatpush1.msra.mxu0 0.0
    %211 = vmatprep.subr.mxu0 0.0
    %212 = vmatpush1.msra.mxu0 0.0
    %213 = vmatprep.subr.mxu0 0.0
    %214 = vmatpush1.msra.mxu0 0.0
    %215 = vmatprep.subr.mxu0 0.0
    %216 = vmatpush1.msra.mxu0 0.0
    %217 = vmatprep.subr.mxu0 0.0
    %218 = vmatpush1.msra.mxu0 0.0
    %219 = vmatprep.subr.mxu0 0.0
    %220 = vmatpush1.msra.mxu0 0.0
    %221 = vmatprep.subr.mxu0 0.0
    %222 = vmatpush1.msra.mxu0 0.0
    %223 = vmatprep.subr.mxu0 0.0
    %224 = vmatpush1.msra.mxu0 0.0
    %225 = vmatprep.subr.mxu0 0.0
    %226 = vmatpush1.msra.mxu0 0.0
    %227 = vmatprep.mubr.f32.mxu0 0.0
    %228 = vmatmul.mubr.f32.gmra.mrb[0].mxu0 %v158
    %v229 = vpop.f32.mrb[0].mxu0
    %v230 = vadd.f32 %v162, %v229
    %v231 = vpop.f32.mrb[0].mxu0
    %232 = vdwg.mxu0
    %v233 = vmax.f32 %v230, 0.0
    %v234 = vlaneseq
    %v235 = vshrl.u32 %v234, 7
    %v236 = vsub.s32 0, %v235
    %v237 = vrot.slane %v75, %v236
    %238 = vmatprep.subr.mxu0 0.0
    %239 = vmatpush1.msra.mxu0 %v57
    %240 = vmatprep.subr.mxu0 0.0
    %241 = vmatpush1.msra.mxu0 %v58
    %242 = vmatprep.subr.mxu0 0.0
    %243 = vmatpush1.msra.mxu0 %v59
    %244 = vmatprep.subr.mxu0 0.0
    %245 = vmatpush1.msra.mxu0 %v60
    %246 = vmatprep.subr.mxu0 0.0
    %247 = vmatpush1.msra.mxu0 %v61
    %248 = vmatprep.subr.mxu0 0.0
    %249 = vmatpush1.msra.mxu0 %v62
    %250 = vmatprep.subr.mxu0 0.0
    %251 = vmatpush1.msra.mxu0 %v63
    %252 = vmatprep.subr.mxu0 0.0
    %253 = vmatpush1.msra.mxu0 %v64
    %254 = vmatprep.subr.mxu0 0.0
    %255 = vmatpush1.msra.mxu0 %v65
    %256 = vmatprep.subr.mxu0 0.0
    %257 = vmatpush1.msra.mxu0 %v66
    %258 = vmatprep.subr.mxu0 0.0
    %259 = vmatpush1.msra.mxu0 %v67
    %260 = vmatprep.subr.mxu0 0.0
    %261 = vmatpush1.msra.mxu0 %v68
    %262 = vmatprep.subr.mxu0 0.0
    %263 = vmatpush1.msra.mxu0 %v69
    %264 = vmatprep.subr.mxu0 0.0
    %265 = vmatpush1.msra.mxu0 %v70
    %266 = vmatprep.subr.mxu0 0.0
    %267 = vmatpush1.msra.mxu0 %v71
    %268 = vmatprep.subr.mxu0 0.0
    %269 = vmatpush1.msra.mxu0 %v72
    %270 = vmatprep.subr.mxu0 0.0
    %271 = vmatpush1.msra.mxu0 0.0
    %272 = vmatprep.subr.mxu0 0.0
    %273 = vmatpush1.msra.mxu0 0.0
    %274 = vmatprep.subr.mxu0 0.0
    %275 = vmatpush1.msra.mxu0 0.0
    %276 = vmatprep.subr.mxu0 0.0
    %277 = vmatpush1.msra.mxu0 0.0
    %278 = vmatprep.subr.mxu0 0.0
    %279 = vmatpush1.msra.mxu0 0.0
    %280 = vmatprep.subr.mxu0 0.0
    %281 = vmatpush1.msra.mxu0 0.0
    %282 = vmatprep.subr.mxu0 0.0
    %283 = vmatpush1.msra.mxu0 0.0
    %284 = vmatprep.subr.mxu0 0.0
    %285 = vmatpush1.msra.mxu0 0.0
    %286 = vmatprep.subr.mxu0 0.0
    %287 = vmatpush1.msra.mxu0 0.0
    %288 = vmatprep.subr.mxu0 0.0
    %289 = vmatpush1.msra.mxu0 0.0
    %290 = vmatprep.subr.mxu0 0.0
    %291 = vmatpush1.msra.mxu0 0.0
    %292 = vmatprep.subr.mxu0 0.0
    %293 = vmatpush1.msra.mxu0 0.0
    %294 = vmatprep.subr.mxu0 0.0
    %295 = vmatpush1.msra.mxu0 0.0
    %296 = vmatprep.subr.mxu0 0.0
    %297 = vmatpush1.msra.mxu0 0.0
    %298 = vmatprep.subr.mxu0 0.0
    %299 = vmatpush1.msra.mxu0 0.0
    %300 = vmatprep.subr.mxu0 0.0
    %301 = vmatpush1.msra.mxu0 0.0
    %302 = vmatprep.mubr.f32.mxu0 0.0
    %303 = vmatmul.mubr.f32.gmra.mrb[0].mxu0 %v233
    %v304 = vpop.f32.mrb[0].mxu0
    %v305 = vadd.f32 %v237, %v304
    %v306 = vpop.f32.mrb[0].mxu0
    %307 = vdwg.mxu0
    %vm308 = vcmask 64512
    %309 = vst.msk [vmem:[#allocation7] sm:$0xff] %vm308, %v305
    // Predicated region
    $region18: #{tpu_custom_call.1} parent=1 // pred_check
      _
    $region19: #{tpu_custom_call.1} parent=1 // pred_check_branch
      %311 = sbr.rel (0) target = $region21
    $region20: #{tpu_custom_call.1} parent=1 // pred_region
      %s313 = ssub.s32 128, 128
      %314 = vsyncadd [#allocation4], %s313
      %s316 = sshll.u32 [#allocation7], 4
      %s317 = int_to_ptr.vmem [resolvable:$true] %s316
      %319 = dma.vmem_to_hbm [thread:$0]  %s317, 128, %s2, [#allocation4]
    $region21: #{tpu_custom_call.1} parent=1 // pred_fallthru
      _
    // Predicated region
    $region22: #{tpu_custom_call.1} parent=1 // pred_check
      _
    $region23: #{tpu_custom_call.1} parent=1 // pred_check_branch
      %321 = sbr.rel (0) target = $region25
    $region24: #{tpu_custom_call.1} parent=1 // pred_region
      %322 = dma.done [#allocation4], 128
    $region25: #{tpu_custom_call.1} parent=1 // pred_fallthru
      _
    %323 = vsyncpa [#allocation3], 1
    %324 = vsyncpa [#allocation6], 1
    %325 = vsyncpa [#allocation4], 1

</llo_original>
